<compile_context>
chip_gen: v7x
topology: tpu7x:2x2x1
jax: 0.10.0
libtpu: 0.0.40
codegen_flags: <defaults>
</compile_context>

<pallas_src>
import functools

import jax
import jax.numpy as jnp
from jax.experimental import pallas as pl
from jax.experimental.pallas import tpu as pltpu

NEG_SLOPE = 0.01  # F.leaky_relu default negative_slope


def _round_up(x, m):
    return ((x + m - 1) // m) * m


def _pick_f_tile(F_p, block_f):
    """Largest multiple of 128 that divides F_p and is <= block_f (F_p % 128 == 0)."""
    best = 128
    t = 128
    cap = min(block_f, F_p)
    while t <= cap:
        if F_p % t == 0:
            best = t
        t += 128
    return best


def ffn_kernel_multi(x_ref, w1_ref, b1_ref, w2_ref, b2_ref, o_ref, acc_ref):
    # Grid: (row_tiles [parallel], f_tiles [arbitrary, reduction]).
    # x_ref: (tm, E)  w1_ref: (E, tf)  b1_ref: (1, tf)
    # w2_ref: (tf, E) b2_ref: (1, E)   o_ref: (tm, E)  acc_ref: (tm, E) f32
    j = pl.program_id(1)

    @pl.when(j == 0)
    def _():
        acc_ref[...] = jnp.zeros_like(acc_ref)

    x = x_ref[...]
    # First matmul on this F chunk, f32 accumulation on the MXU.
    h = jnp.dot(x, w1_ref[...], preferred_element_type=jnp.float32) + b1_ref[...]
    # LeakyReLU (elementwise -> safe under F-tiling).
    h = jnp.where(h > 0, h, NEG_SLOPE * h)
    # Dropout: eval/inference mode -> identity.
    # Second matmul chunk, accumulated into the resident f32 scratch.
    acc_ref[...] += jnp.dot(h.astype(x.dtype), w2_ref[...],
                            preferred_element_type=jnp.float32)

    @pl.when(j == pl.num_programs(1) - 1)
    def _():
        o_ref[...] = (acc_ref[...] + b2_ref[...]).astype(o_ref.dtype)


def ffn_kernel_single(x_ref, w1_ref, b1_ref, w2_ref, b2_ref, o_ref):
    # Whole F resident: no accumulator scratch, direct output write.
    x = x_ref[...]
    h = jnp.dot(x, w1_ref[...], preferred_element_type=jnp.float32) + b1_ref[...]
    h = jnp.where(h > 0, h, NEG_SLOPE * h)
    o_ref[...] = (jnp.dot(h.astype(x.dtype), w2_ref[...],
                          preferred_element_type=jnp.float32)
                  + b2_ref[...]).astype(o_ref.dtype)


@functools.partial(jax.jit, static_argnames=("block_rows", "block_f"))
def feed_forward(x, w1, b1, w2, b2, block_rows=256, block_f=512):
    """x: (B, S, E). w1: (E, F), b1: (F,), w2: (F, E), b2: (E,)."""
    B, S, E = x.shape
    F_dim = w1.shape[1]
    rows = B * S
    x2d = x.reshape(rows, E)

    # ---- lane-dense padding (multiples of 128) for E and F ------------------
    E_p = _round_up(E, 128)
    F_p = _round_up(F_dim, 128)
    if E_p != E:
        # Zero-pad: extra x columns hit zero W1 rows; extra output columns sliced off.
        x2d = jnp.pad(x2d, ((0, 0), (0, E_p - E)))
        w1 = jnp.pad(w1, ((0, E_p - E), (0, 0)))
        w2 = jnp.pad(w2, ((0, 0), (0, E_p - E)))
        b2 = jnp.pad(b2, (0, E_p - E))
    if F_p != F_dim:
        # Zero-pad F: leaky_relu(0 + 0) == 0, so padded hidden cols contribute nothing.
        w1 = jnp.pad(w1, ((0, 0), (0, F_p - F_dim)))
        b1 = jnp.pad(b1, (0, F_p - F_dim))
        w2 = jnp.pad(w2, ((0, F_p - F_dim), (0, 0)))

    # ---- tile sizes ----------------------------------------------------------
    if rows <= block_rows:
        tm = rows            # full-dim block (always legal), avoids any row padding
    else:
        tm = block_rows      # multiple of 8; partial last block is masked by Pallas
    tf = _pick_f_tile(F_p, block_f)   # must divide F_p exactly (reduction axis)
    n_row_tiles = pl.cdiv(rows, tm)
    n_f_tiles = F_p // tf

    b1_2d = b1.reshape(1, F_p)
    b2_2d = b2.reshape(1, E_p)

    itemsize = x2d.dtype.itemsize
    flops = 4 * rows * E_p * F_p
    bytes_accessed = (x2d.size * itemsize
                      + w1.size * w1.dtype.itemsize
                      + w2.size * w2.dtype.itemsize
                      + b1_2d.size * b1_2d.dtype.itemsize
                      + b2_2d.size * b2_2d.dtype.itemsize
                      + rows * E_p * itemsize)
    cost = pl.CostEstimate(flops=flops, transcendentals=0,
                           bytes_accessed=bytes_accessed)
    cparams_kwargs = dict(vmem_limit_bytes=64 * 1024 * 1024)

    if n_f_tiles == 1:
        # -------- fast path: whole F in one tile, no accumulator scratch -----
        out = pl.pallas_call(
            ffn_kernel_single,
            out_shape=jax.ShapeDtypeStruct((rows, E_p), x.dtype),
            grid_spec=pltpu.PrefetchScalarGridSpec(
                num_scalar_prefetch=0,
                grid=(n_row_tiles,),
                in_specs=[
                    pl.BlockSpec((tm, E_p), lambda i: (i, 0)),   # x tile
                    pl.BlockSpec((E_p, F_p), lambda i: (0, 0)),  # W1 (resident)
                    pl.BlockSpec((1, F_p),   lambda i: (0, 0)),  # b1 (resident)
                    pl.BlockSpec((F_p, E_p), lambda i: (0, 0)),  # W2 (resident)
                    pl.BlockSpec((1, E_p),   lambda i: (0, 0)),  # b2 (resident)
                ],
                out_specs=pl.BlockSpec((tm, E_p), lambda i: (i, 0)),
            ),
            compiler_params=pltpu.CompilerParams(
                dimension_semantics=("parallel",), **cparams_kwargs),
            cost_estimate=cost,
        )(x2d, w1, b1_2d, w2, b2_2d)
    else:
        # -------- streaming path: F-reduction axis with f32 accumulator ------
        out = pl.pallas_call(
            ffn_kernel_multi,
            out_shape=jax.ShapeDtypeStruct((rows, E_p), x.dtype),
            grid_spec=pltpu.PrefetchScalarGridSpec(
                num_scalar_prefetch=0,
                grid=(n_row_tiles, n_f_tiles),
                in_specs=[
                    pl.BlockSpec((tm, E_p), lambda i, j: (i, 0)),   # x tile (reused over j)
                    pl.BlockSpec((E_p, tf), lambda i, j: (0, j)),   # W1 column chunk
                    pl.BlockSpec((1, tf),   lambda i, j: (0, j)),   # b1 chunk
                    pl.BlockSpec((tf, E_p), lambda i, j: (j, 0)),   # W2 row chunk
                    pl.BlockSpec((1, E_p),  lambda i, j: (0, 0)),   # b2 (resident)
                ],
                out_specs=pl.BlockSpec((tm, E_p), lambda i, j: (i, 0)),
                scratch_shapes=[pltpu.VMEM((tm, E_p), jnp.float32)],
            ),
            compiler_params=pltpu.CompilerParams(
                dimension_semantics=("parallel", "arbitrary"), **cparams_kwargs),
            cost_estimate=cost,
        )(x2d, w1, b1_2d, w2, b2_2d)

    if E_p != E:
        out = out[:, :E]
    return out.reshape(B, S, E)


def init_params(key, emb_dim, ffwd_dim, dtype=jnp.float32):
    """Deterministic init mirroring nn.Linear shapes.
    PyTorch Linear stores weight (out, in); we keep the (in, out) transpose so the
    kernel computes x @ W, mathematically identical to x @ weight.T."""
    k1, k2, k3, k4 = jax.random.split(key, 4)
    bound1 = 1.0 / (emb_dim ** 0.5)
    bound2 = 1.0 / (ffwd_dim ** 0.5)
    w1 = jax.random.uniform(k1, (emb_dim, ffwd_dim), dtype, -bound1, bound1)
    b1 = jax.random.uniform(k2, (ffwd_dim,), dtype, -bound1, bound1)
    w2 = jax.random.uniform(k3, (ffwd_dim, emb_dim), dtype, -bound2, bound2)
    b2 = jax.random.uniform(k4, (emb_dim,), dtype, -bound2, bound2)
    return w1, b1, w2, b2


def feed_forward_ref(x, w1, b1, w2, b2):
    h = x @ w1 + b1
    h = jnp.where(h > 0, h, NEG_SLOPE * h)
    return h @ w2 + b2


if __name__ == "__main__":
    key = jax.random.PRNGKey(0)
    kx, kp, kx2, kp2 = jax.random.split(key, 4)

    # --- test 1: lane-dense shapes, F-streaming (accumulator) path -----------
    emb_dim, ffwd_dim = 128, 256
    B, S = 2, 8
    x = jax.random.normal(kx, (B, S, emb_dim), jnp.float32)
    w1, b1, w2, b2 = init_params(kp, emb_dim, ffwd_dim)

    out_multi = feed_forward(x, w1, b1, w2, b2, block_rows=256, block_f=128)
    out_multi = jax.block_until_ready(out_multi)
    ref = feed_forward_ref(x, w1, b1, w2, b2)
    assert out_multi.shape == (B, S, emb_dim)
    assert jnp.allclose(out_multi, ref, atol=1e-4, rtol=1e-4)

    # --- test 2: same shapes, single-F-tile fast path -------------------------
    out_single = feed_forward(x, w1, b1, w2, b2, block_rows=256, block_f=512)
    out_single = jax.block_until_ready(out_single)
    assert jnp.allclose(out_single, ref, atol=1e-4, rtol=1e-4)

    # --- test 3: ragged dims (exercise E/F padding + slicing) -----------------
    emb_dim2, ffwd_dim2 = 96, 200
    B2, S2 = 2, 8
    x2 = jax.random.normal(kx2, (B2, S2, emb_dim2), jnp.float32)
    w1b, b1b, w2b, b2b = init_params(kp2, emb_dim2, ffwd_dim2)
    out_rag = feed_forward(x2, w1b, b1b, w2b, b2b, block_rows=256, block_f=128)
    out_rag = jax.block_until_ready(out_rag)
    ref_rag = feed_forward_ref(x2, w1b, b1b, w2b, b2b)
    assert out_rag.shape == (B2, S2, emb_dim2)
    assert jnp.allclose(out_rag, ref_rag, atol=1e-4, rtol=1e-4)

    print("KERNEL_OK")
</pallas_src>

<mosaic_0001>
module attributes {stable_mosaic.version = 11 : i64} {
  func.func @ffn_kernel_multi(%arg0: i32, %arg1: i32, %arg2: memref<16x128xf32, #tpu.memory_space<vmem>>, %arg3: memref<128x128xf32, #tpu.memory_space<vmem>>, %arg4: memref<1x128xf32, #tpu.memory_space<vmem>>, %arg5: memref<128x128xf32, #tpu.memory_space<vmem>>, %arg6: memref<1x128xf32, #tpu.memory_space<vmem>>, %arg7: memref<16x128xf32, #tpu.memory_space<vmem>>, %arg8: memref<16x128xf32, #tpu.memory_space<vmem>>) attributes {dimension_semantics = [#tpu.dimension_semantics<parallel>, #tpu.dimension_semantics<arbitrary>], iteration_bounds = array<i64: 1, 2>, scalar_prefetch = 0 : i64, scratch_operands = 1 : i64, tpu.core_type = #tpu.core_type<tc>, window_params = [{transform_indices = @transform_0, window_bounds = array<i64: 16, 128>}, {transform_indices = @transform_1, window_bounds = array<i64: 128, 128>}, {transform_indices = @transform_2, window_bounds = array<i64: 1, 128>}, {transform_indices = @transform_3, window_bounds = array<i64: 128, 128>}, {pipeline_mode = #tpu.pipeline_mode<synchronous>, transform_indices = @transform_4, window_bounds = array<i64: 1, 128>}, {transform_indices = @transform_5, window_bounds = array<i64: 16, 128>}]} {
    %c0_i32 = arith.constant 0 : i32
    %0 = arith.cmpi eq, %arg1, %c0_i32 : i32
    %1 = arith.extui %0 : i1 to i32
    %c0_i32_0 = arith.constant 0 : i32
    %2 = arith.cmpi ne, %1, %c0_i32_0 : i32
    scf.if %2 {
      %cst_16 = arith.constant 0.000000e+00 : f32
      %22 = vector.broadcast %cst_16 : f32 to vector<16x128xf32>
      %c0_17 = arith.constant 0 : index
      %c0_18 = arith.constant 0 : index
      %23 = vector.load %arg8[%c0_17, %c0_18] : memref<16x128xf32, #tpu.memory_space<vmem>>, vector<16x128xf32>
      tpu.vector_store %arg8[%c0_17, %c0_18], %22 {strides = array<i32>} : memref<16x128xf32, #tpu.memory_space<vmem>>, vector<16x128xf32>,
    } else {
    }
    %c0 = arith.constant 0 : index
    %c0_1 = arith.constant 0 : index
    %3 = vector.load %arg2[%c0, %c0_1] : memref<16x128xf32, #tpu.memory_space<vmem>>, vector<16x128xf32>
    %c0_2 = arith.constant 0 : index
    %c0_3 = arith.constant 0 : index
    %4 = vector.load %arg3[%c0_2, %c0_3] : memref<128x128xf32, #tpu.memory_space<vmem>>, vector<128x128xf32>
    %cst = arith.constant dense<0.000000e+00> : vector<16x128xf32>
    %5 = tpu.matmul %3, %4, %cst {dimension_numbers = #tpu.dot_dimension_numbers<[1], [0], [0], [1], [0, 0, 1, 1], [], []>} : vector<16x128xf32>, vector<128x128xf32>, vector<16x128xf32> -> vector<16x128xf32>
    %c0_4 = arith.constant 0 : index
    %c0_5 = arith.constant 0 : index
    %6 = vector.load %arg4[%c0_4, %c0_5] : memref<1x128xf32, #tpu.memory_space<vmem>>, vector<1x128xf32>
    %7 = vector.broadcast %6 : vector<1x128xf32> to vector<16x128xf32>
    %8 = arith.addf %5, %7 : vector<16x128xf32>
    %cst_6 = arith.constant 0.000000e+00 : f32
    %9 = vector.broadcast %cst_6 : f32 to vector<16x128xf32>
    %10 = arith.cmpf ogt, %8, %9 : vector<16x128xf32>
    %cst_7 = arith.constant 0.00999999977 : f32
    %11 = vector.broadcast %cst_7 : f32 to vector<16x128xf32>
    %12 = arith.mulf %11, %8 : vector<16x128xf32>
    %13 = arith.select %10, %8, %12 : vector<16x128xi1>, vector<16x128xf32>
    %c0_8 = arith.constant 0 : index
    %c0_9 = arith.constant 0 : index
    %14 = vector.load %arg8[%c0_8, %c0_9] : memref<16x128xf32, #tpu.memory_space<vmem>>, vector<16x128xf32>
    %c0_10 = arith.constant 0 : index
    %c0_11 = arith.constant 0 : index
    %15 = vector.load %arg5[%c0_10, %c0_11] : memref<128x128xf32, #tpu.memory_space<vmem>>, vector<128x128xf32>
    %cst_12 = arith.constant dense<0.000000e+00> : vector<16x128xf32>
    %16 = tpu.matmul %13, %15, %cst_12 {dimension_numbers = #tpu.dot_dimension_numbers<[1], [0], [0], [1], [0, 0, 1, 1], [], []>} : vector<16x128xf32>, vector<128x128xf32>, vector<16x128xf32> -> vector<16x128xf32>
    %17 = arith.addf %14, %16 : vector<16x128xf32>
    %c0_13 = arith.constant 0 : index
    %c0_14 = arith.constant 0 : index
    %18 = vector.load %arg8[%c0_13, %c0_14] : memref<16x128xf32, #tpu.memory_space<vmem>>, vector<16x128xf32>
    tpu.vector_store %arg8[%c0_13, %c0_14], %17 {strides = array<i32>} : memref<16x128xf32, #tpu.memory_space<vmem>>, vector<16x128xf32>,
    %c1_i32 = arith.constant 1 : i32
    %19 = arith.cmpi eq, %arg1, %c1_i32 : i32
    %20 = arith.extui %19 : i1 to i32
    %c0_i32_15 = arith.constant 0 : i32
    %21 = arith.cmpi ne, %20, %c0_i32_15 : i32
    scf.if %21 {
      %c0_16 = arith.constant 0 : index
      %c0_17 = arith.constant 0 : index
      %22 = vector.load %arg8[%c0_16, %c0_17] : memref<16x128xf32, #tpu.memory_space<vmem>>, vector<16x128xf32>
      %c0_18 = arith.constant 0 : index
      %c0_19 = arith.constant 0 : index
      %23 = vector.load %arg6[%c0_18, %c0_19] : memref<1x128xf32, #tpu.memory_space<vmem>>, vector<1x128xf32>
      %24 = vector.broadcast %23 : vector<1x128xf32> to vector<16x128xf32>
      %25 = arith.addf %22, %24 : vector<16x128xf32>
      %c0_20 = arith.constant 0 : index
      %c0_21 = arith.constant 0 : index
      %26 = vector.load %arg7[%c0_20, %c0_21] : memref<16x128xf32, #tpu.memory_space<vmem>>, vector<16x128xf32>
      tpu.vector_store %arg7[%c0_20, %c0_21], %25 {strides = array<i32>} : memref<16x128xf32, #tpu.memory_space<vmem>>, vector<16x128xf32>,
    } else {
    }
    return
  }
  func.func @transform_0(%arg0: i32, %arg1: i32) -> (i32, i32) {
    %c0_i32 = arith.constant 0 : i32
    %c0_i32_0 = arith.constant 0 : i32
    return %arg0, %c0_i32 : i32, i32
  }
  func.func @transform_1(%arg0: i32, %arg1: i32) -> (i32, i32) {
    %c0_i32 = arith.constant 0 : i32
    %c0_i32_0 = arith.constant 0 : i32
    return %c0_i32, %arg1 : i32, i32
  }
  func.func @transform_2(%arg0: i32, %arg1: i32) -> (i32, i32) {
    %c0_i32 = arith.constant 0 : i32
    %c0_i32_0 = arith.constant 0 : i32
    return %c0_i32, %arg1 : i32, i32
  }
  func.func @transform_3(%arg0: i32, %arg1: i32) -> (i32, i32) {
    %c0_i32 = arith.constant 0 : i32
    %c0_i32_0 = arith.constant 0 : i32
    return %arg1, %c0_i32 : i32, i32
  }
  func.func @transform_4(%arg0: i32, %arg1: i32) -> (i32, i32) {
    %c0_i32 = arith.constant 0 : i32
    %c0_i32_0 = arith.constant 0 : i32
    %c0_i32_1 = arith.constant 0 : i32
    return %c0_i32, %c0_i32_0 : i32, i32
  }
  func.func @transform_5(%arg0: i32, %arg1: i32) -> (i32, i32) {
    %c0_i32 = arith.constant 0 : i32
    %c0_i32_0 = arith.constant 0 : i32
    return %arg0, %c0_i32 : i32, i32
  }
}

</mosaic_0001>

<llo_original>
// kernel: feed_forward.1
$region0: #{feed_forward.1}
  #allocation0 [shape = 'u32[]', space=smem, size = 0x4, offset = 0x4, fixed_abs, tag = 'smem constant byte address 0x4 - core index']
  #allocation1 [shape = 'u32[144,128]{1,0:T(1,128)}', space=vmem, size = 0x12000, scoped, tag = 'internal scratch']
  #allocation2 [shape = 'f32[16,128]{1,0:T(8,128)}', space=vmem, size = 0x2000, scoped, tag = 'scratch operand']
  %s0 = inlined_call_operand.hbm [shape: f32[16,128], index: 0, kind: input, shape index: {}]
  %s1 = inlined_call_operand.hbm [shape: f32[128,256], index: 1, kind: input, shape index: {}]
  %s2 = inlined_call_operand.hbm [shape: f32[1,256], index: 2, kind: input, shape index: {}]
  %s3 = inlined_call_operand.hbm [shape: f32[256,128], index: 3, kind: input, shape index: {}]
  %s4 = inlined_call_operand.hbm [shape: f32[1,128], index: 4, kind: input, shape index: {}]
  %s5 = inlined_call_operand.hbm [shape: f32[16,128], index: 5, kind: output, shape index: {}]
  %s6 = sld [smem:[#allocation0]]
  $region81: #{feed_forward.1} parent=0
    _
  %s8 = ssub.s32 1, %s6
  %s9 = scalar_select 0, %s8, %s6
  $region1: #{feed_forward.1} parent=0
    #allocation3 [shape = 'u8[8192]{0}', space=vmem, size = 0x2000, scoped, tag = 'input window, operand 0, single buffered']
    #allocation4 [shape = 's32[2]{0}', space=sflag, size = 0x8, scoped, tag = 'scoped memory for feed_forward.1']
    #allocation5 [shape = 's32[2]{0}', space=sflag, size = 0x8, scoped, tag = 'scoped memory for feed_forward.1']
    #allocation6 [shape = 'u8[131072]{0}', space=vmem, size = 0x20000, scoped, tag = 'input window, operand 1']
    #allocation7 [shape = 's32[2]{0}', space=sflag, size = 0x8, scoped, tag = 'scoped memory for feed_forward.1']
    #allocation8 [shape = 'u8[1024]{0}', space=vmem, size = 0x400, scoped, tag = 'input window, operand 2']
    #allocation9 [shape = 'u8[131072]{0}', space=vmem, size = 0x20000, scoped, tag = 'input window, operand 3']
    #allocation10 [shape = 's32[2]{0}', space=sflag, size = 0x8, scoped, tag = 'scoped memory for feed_forward.1']
    #allocation11 [shape = 'u8[512]{0}', space=vmem, size = 0x400, scoped, tag = 'input window, operand 4, single buffered']
    #allocation12 [shape = 'u8[8192]{0}', space=vmem, size = 0x2000, scoped, tag = 'output window, operand 0, single buffered']
    %10 = vsyncpa [#allocation4], 0
    %11 = vsyncpa [#allocation7], 0
    %s12 = scalar_lea.sflag [#allocation7], 1
    %13 = vsyncpa %s12, 0
    %14 = vsyncpa [#allocation10], 0
    %s15 = scalar_lea.sflag [#allocation10], 1
    %16 = vsyncpa %s15, 0
    %17 = vsyncpa [#allocation5], 0
    loop: start=0, step=1, limit=4
    $region2: #{feed_forward.1} parent=1 // loop_pre_header
      _
    $region3: #{feed_forward.1} parent=1 // loop_header
      %s19 = sphi 0, %s23
      %p20 = scmp.ge.s32.totalorder %s19, 4
      %s26 = sphi 0, %s38
      %s27 = sphi 0, %s34
      %s28 = sphi 0, %s26
      %s29 = sphi 0, %s27
      %s30 = sphi 0, %s28
      %s31 = sphi 0, %s29
      %s41 = sphi 0, %s43
      %s44 = sphi 0, %s41
      %s45 = sphi 0, %s44
      %s61 = sphi 0, %s45
      %s67 = sphi 0, %s69
      %s70 = sphi 0, %s67
      %s71 = sphi 0, %s70
      %s87 = sphi 0, %s71
      %s93 = sphi 0, %s95
      %s96 = sphi 0, %s93
      %s97 = sphi 0, %s96
      %s113 = sphi 0, %s97
      %s119 = sphi 0, %s121
      %s122 = sphi 0, %s119
      %s123 = sphi 0, %s122
      %s139 = sphi 0, %s123
      %s143 = sphi 0, %s143
      %s145 = sphi 0, %s143
      %s146 = sphi 0, %s145
      %s160 = sphi 0, %s146
      %s166 = sphi 0, %s168
      %s169 = sphi 0, %s166
      %s170 = sphi 0, %s169
      %s186 = sphi 0, %s170
    $region4: #{feed_forward.1} parent=1 // loop_header_branch
      %22 = sbr.rel (%p20) target = $region8
    $region5: #{feed_forward.1} parent=1 // loop_body
      %s24 = ssub.s32 %s19, 1
      %s25 = ssub.s32 %s19, 2
      %s32 = sadd.s32 1, %s27
      %p33 = scmp.ge.s32.totalorder %s32, 2
      %s34 = scalar_select %p33, 0, %s32
      %s35 = sadd.s32 1, %s26
      %s36 = scalar_select %p33, %s35, %s26
      %p37 = scmp.ge.s32.totalorder %s36, 1
      %s38 = scalar_select %p37, 0, %s36
      %s39 = ssub.s32 %s26, %s38
      %p40 = scmp.eq.s32.totalorder %s39, 0
      %s42 = sadd.s32 %s41, 1
      %s43 = scalar_select %p40, %s41, %s42
      %p46 = pneg %p40
      %p47 = scmp.eq.s32.totalorder %s19, 1
      %p48 = por %p46, %p47
      %p49 = scmp.ne.s32.totalorder %s41, %s44
      %p50 = scmp.eq.s32.totalorder %s19, 0
      %p51 = por %p49, %p50
      %p52 = scmp.ne.s32.totalorder %s41, %s44
      %p53 = scmp.eq.s32.totalorder %s24, 1
      %p54 = por %p52, %p53
      %p55 = scmp.ne.s32.totalorder %s44, %s45
      %p56 = scmp.eq.s32.totalorder %s24, 0
      %p57 = por %p55, %p56
      %p58 = scmp.ne.s32.totalorder %s44, %s45
      %p59 = scmp.eq.s32.totalorder %s25, 1
      %p60 = por %p58, %p59
      %p62 = scmp.ne.s32.totalorder %s45, %s61
      %p63 = scmp.eq.s32.totalorder %s25, 0
      %p64 = por %p62, %p63
      %s65 = ssub.s32 %s27, %s34
      %p66 = scmp.eq.s32.totalorder %s65, 0
      %s68 = sadd.s32 %s67, 1
      %s69 = scalar_select %p66, %s67, %s68
      %p72 = pneg %p66
      %p73 = scmp.eq.s32.totalorder %s19, 1
      %p74 = por %p72, %p73
      %p75 = scmp.ne.s32.totalorder %s67, %s70
      %p76 = scmp.eq.s32.totalorder %s19, 0
      %p77 = por %p75, %p76
      %p78 = scmp.ne.s32.totalorder %s67, %s70
      %p79 = scmp.eq.s32.totalorder %s24, 1
      %p80 = por %p78, %p79
      %p81 = scmp.ne.s32.totalorder %s70, %s71
      %p82 = scmp.eq.s32.totalorder %s24, 0
      %p83 = por %p81, %p82
      %p84 = scmp.ne.s32.totalorder %s70, %s71
      %p85 = scmp.eq.s32.totalorder %s25, 1
      %p86 = por %p84, %p85
      %p88 = scmp.ne.s32.totalorder %s71, %s87
      %p89 = scmp.eq.s32.totalorder %s25, 0
      %p90 = por %p88, %p89
      %s91 = ssub.s32 %s27, %s34
      %p92 = scmp.eq.s32.totalorder %s91, 0
      %s94 = sadd.s32 %s93, 1
      %s95 = scalar_select %p92, %s93, %s94
      %p98 = pneg %p92
      %p99 = scmp.eq.s32.totalorder %s19, 1
      %p100 = por %p98, %p99
      %p101 = scmp.ne.s32.totalorder %s93, %s96
      %p102 = scmp.eq.s32.totalorder %s19, 0
      %p103 = por %p101, %p102
      %p104 = scmp.ne.s32.totalorder %s93, %s96
      %p105 = scmp.eq.s32.totalorder %s24, 1
      %p106 = por %p104, %p105
      %p107 = scmp.ne.s32.totalorder %s96, %s97
      %p108 = scmp.eq.s32.totalorder %s24, 0
      %p109 = por %p107, %p108
      %p110 = scmp.ne.s32.totalorder %s96, %s97
      %p111 = scmp.eq.s32.totalorder %s25, 1
      %p112 = por %p110, %p111
      %p114 = scmp.ne.s32.totalorder %s97, %s113
      %p115 = scmp.eq.s32.totalorder %s25, 0
      %p116 = por %p114, %p115
      %s117 = ssub.s32 %s27, %s34
      %p118 = scmp.eq.s32.totalorder %s117, 0
      %s120 = sadd.s32 %s119, 1
      %s121 = scalar_select %p118, %s119, %s120
      %p124 = pneg %p118
      %p125 = scmp.eq.s32.totalorder %s19, 1
      %p126 = por %p124, %p125
      %p127 = scmp.ne.s32.totalorder %s119, %s122
      %p128 = scmp.eq.s32.totalorder %s19, 0
      %p129 = por %p127, %p128
      %p130 = scmp.ne.s32.totalorder %s119, %s122
      %p131 = scmp.eq.s32.totalorder %s24, 1
      %p132 = por %p130, %p131
      %p133 = scmp.ne.s32.totalorder %s122, %s123
      %p134 = scmp.eq.s32.totalorder %s24, 0
      %p135 = por %p133, %p134
      %p136 = scmp.ne.s32.totalorder %s122, %s123
      %p137 = scmp.eq.s32.totalorder %s25, 1
      %p138 = por %p136, %p137
      %p140 = scmp.ne.s32.totalorder %s123, %s139
      %p141 = scmp.eq.s32.totalorder %s25, 0
      %p142 = por %p140, %p141
      %s144 = sadd.s32 %s143, 1
      %p147 = scmp.eq.s32.totalorder %s19, 1
      %p148 = scmp.ne.s32.totalorder %s143, %s145
      %p149 = scmp.eq.s32.totalorder %s19, 0
      %p150 = por %p148, %p149
      %p151 = scmp.ne.s32.totalorder %s143, %s145
      %p152 = scmp.eq.s32.totalorder %s24, 1
      %p153 = por %p151, %p152
      %p154 = scmp.ne.s32.totalorder %s145, %s146
      %p155 = scmp.eq.s32.totalorder %s24, 0
      %p156 = por %p154, %p155
      %p157 = scmp.ne.s32.totalorder %s145, %s146
      %p158 = scmp.eq.s32.totalorder %s25, 1
      %p159 = por %p157, %p158
      %p161 = scmp.ne.s32.totalorder %s146, %s160
      %p162 = scmp.eq.s32.totalorder %s25, 0
      %p163 = por %p161, %p162
      %s164 = ssub.s32 %s26, %s38
      %p165 = scmp.eq.s32.totalorder %s164, 0
      %s167 = sadd.s32 %s166, 1
      %s168 = scalar_select %p165, %s166, %s167
      %p171 = pneg %p165
      %p172 = scmp.eq.s32.totalorder %s19, 1
      %p173 = por %p171, %p172
      %p174 = scmp.ne.s32.totalorder %s166, %s169
      %p175 = scmp.eq.s32.totalorder %s19, 0
      %p176 = por %p174, %p175
      %p177 = scmp.ne.s32.totalorder %s166, %s169
      %p178 = scmp.eq.s32.totalorder %s24, 1
      %p179 = por %p177, %p178
      %p180 = scmp.ne.s32.totalorder %s169, %s170
      %p181 = scmp.eq.s32.totalorder %s24, 0
      %p182 = por %p180, %p181
      %p183 = scmp.ne.s32.totalorder %s169, %s170
      %p184 = scmp.eq.s32.totalorder %s25, 1
      %p185 = por %p183, %p184
      %p187 = scmp.ne.s32.totalorder %s170, %s186
      %p188 = scmp.eq.s32.totalorder %s25, 0
      %p189 = por %p187, %p188
      %p190 = scmp.le.s32.totalorder 1, %s19
      %p191 = scmp.lt.s32.totalorder %s19, 3
      %p192 = pnand %p190, %p191
      %p193 = pneg %p192
      // Predicated region
      $region9: #{feed_forward.1} parent=5 // pred_check
        _
      $region10: #{feed_forward.1} parent=5 // pred_check_branch
        %195 = sbr.rel (%p192) target = $region12
      $region11: #{feed_forward.1} parent=5 // pred_region
        %s196 = ssub.s32 %s19, 1
        // Predicated region
        $region13: #{feed_forward.1} parent=11 // pred_check
          %p197 = pneg %p57
        $region14: #{feed_forward.1} parent=11 // pred_check_branch
          %199 = sbr.rel (%p197) target = $region16
        $region15: #{feed_forward.1} parent=11 // pred_region
          %s200 = smul.u32 2, %s28
          %s202 = ssub.s32 256, 256
          %203 = vsyncadd [#allocation4], %s202
          %s204 = smul.addr %s200, 128
          %s205 = scalar_lea.hbm %s0, %s204
          %s206 = sshll.u32 [#allocation3], 4
          %s207 = int_to_ptr.vmem [resolvable:$true] %s206
          %212 = dma.hbm_to_vmem [thread:$0]  %s205, 256, %s207, [#allocation4], 128, 128, 8
        $region16: #{feed_forward.1} parent=11 // pred_fallthru
          _
        // Predicated region
        $region17: #{feed_forward.1} parent=11 // pred_check
          %p213 = pneg %p156
        $region18: #{feed_forward.1} parent=11 // pred_check_branch
          %215 = sbr.rel (%p213) target = $region20
        $region19: #{feed_forward.1} parent=11 // pred_region
          %s217 = ssub.s32 16, 16
          %218 = vsyncadd [#allocation10], %s217
          %s220 = sshll.u32 [#allocation11], 4
          %s221 = int_to_ptr.vmem [resolvable:$true] %s220
          %223 = dma.hbm_to_vmem [thread:$0]  %s4, 16, %s221, [#allocation10]
        $region20: #{feed_forward.1} parent=11 // pred_fallthru
          _
      $region12: #{feed_forward.1} parent=5 // pred_fallthru
        _
      %p224 = scmp.lt.s32.totalorder %s19, 2
      // Predicated region
      $region21: #{feed_forward.1} parent=5 // pred_check
        %p225 = pneg %p224
      $region22: #{feed_forward.1} parent=5 // pred_check_branch
        %227 = sbr.rel (%p225) target = $region24
      $region23: #{feed_forward.1} parent=5 // pred_region
        // Predicated region
        $region25: #{feed_forward.1} parent=23 // pred_check
          %p228 = pneg %p77
        $region26: #{feed_forward.1} parent=23 // pred_check_branch
          %230 = sbr.rel (%p228) target = $region28
        $region27: #{feed_forward.1} parent=23 // pred_region
          %s231 = sand.u32 %s19, 1
          %s232 = scalar_lea.sflag [#allocation7], %s231
          %s233 = sand.u32 %s67, 1
          %s234 = smul.addr %s233, 128
          %s235 = scalar_lea.vmem [#allocation6], %s234
          %s237 = ssub.s32 2048, 2048
          %238 = vsyncadd %s232, %s237
          %s239 = smul.addr %s27, 128
          %s240 = scalar_lea.hbm %s1, %s239
          %s241 = sshll.u32 %s235, 4
          %s242 = int_to_ptr.vmem [resolvable:$true] %s241
          %247 = dma.hbm_to_vmem [thread:$0]  %s240, 2048, %s242, %s232, 256, 128, 8
        $region28: #{feed_forward.1} parent=23 // pred_fallthru
          _
        // Predicated region
        $region29: #{feed_forward.1} parent=23 // pred_check
          %p248 = pneg %p103
        $region30: #{feed_forward.1} parent=23 // pred_check_branch
          %250 = sbr.rel (%p248) target = $region32
        $region31: #{feed_forward.1} parent=23 // pred_region
          %s251 = sand.u32 %s19, 1
          %s252 = scalar_lea.sflag [#allocation7], %s251
          %s253 = sand.u32 %s93, 1
          %s254 = scalar_lea.vmem [#allocation8], %s253
          %s256 = ssub.s32 16, 16
          %257 = vsyncadd %s252, %s256
          %s258 = smul.addr %s27, 16
          %s259 = scalar_lea.hbm %s2, %s258
          %s261 = sshll.u32 %s254, 4
          %s262 = int_to_ptr.vmem [resolvable:$true] %s261
          %264 = dma.hbm_to_vmem [thread:$0]  %s259, 16, %s262, %s252
        $region32: #{feed_forward.1} parent=23 // pred_fallthru
          _
        // Predicated region
        $region33: #{feed_forward.1} parent=23 // pred_check
          %p265 = pneg %p129
        $region34: #{feed_forward.1} parent=23 // pred_check_branch
          %267 = sbr.rel (%p265) target = $region36
        $region35: #{feed_forward.1} parent=23 // pred_region
          %s268 = sand.u32 %s19, 1
          %s269 = scalar_lea.sflag [#allocation10], %s268
          %s270 = sand.u32 %s119, 1
          %s271 = smul.addr %s270, 128
          %s272 = scalar_lea.vmem [#allocation9], %s271
          %s273 = smul.u32 16, %s27
          %s275 = ssub.s32 2048, 2048
          %276 = vsyncadd %s269, %s275
          %s277 = smul.addr %s273, 128
          %s278 = scalar_lea.hbm %s3, %s277
          %s279 = sshll.u32 %s272, 4
          %s280 = int_to_ptr.vmem [resolvable:$true] %s279
          %285 = dma.hbm_to_vmem [thread:$0]  %s278, 2048, %s280, %s269, 128, 128, 8
        $region36: #{feed_forward.1} parent=23 // pred_fallthru
          _
      $region24: #{feed_forward.1} parent=5 // pred_fallthru
        _
      %p286 = scmp.le.s32.totalorder 1, %s19
      %p287 = scmp.lt.s32.totalorder %s19, 3
      %p288 = pnand %p286, %p287
      %p289 = pneg %p288
      // Predicated region
      $region37: #{feed_forward.1} parent=5 // pred_check
        _
      $region38: #{feed_forward.1} parent=5 // pred_check_branch
        %291 = sbr.rel (%p288) target = $region40
      $region39: #{feed_forward.1} parent=5 // pred_region
        %s292 = ssub.s32 %s19, 1
        // Predicated region
        $region41: #{feed_forward.1} parent=39 // pred_check
          %p293 = pneg %p57
        $region42: #{feed_forward.1} parent=39 // pred_check_branch
          %295 = sbr.rel (%p293) target = $region44
        $region43: #{feed_forward.1} parent=39 // pred_region
          %296 = dma.done [#allocation4], 256
        $region44: #{feed_forward.1} parent=39 // pred_fallthru
          _
        %s297 = sand.u32 %s24, 1
        %s298 = scalar_lea.sflag [#allocation7], %s297
        %s299 = sand.u32 %s70, 1
        %s300 = smul.addr %s299, 128
        %s301 = scalar_lea.vmem [#allocation6], %s300
        // Predicated region
        $region45: #{feed_forward.1} parent=39 // pred_check
          %p302 = pneg %p83
        $region46: #{feed_forward.1} parent=39 // pred_check_branch
          %304 = sbr.rel (%p302) target = $region48
        $region47: #{feed_forward.1} parent=39 // pred_region
          %305 = dma.done %s298, 2048
        $region48: #{feed_forward.1} parent=39 // pred_fallthru
          _
        %s306 = sand.u32 %s24, 1
        %s307 = scalar_lea.sflag [#allocation7], %s306
        %s308 = sand.u32 %s96, 1
        %s309 = scalar_lea.vmem [#allocation8], %s308
        // Predicated region
        $region49: #{feed_forward.1} parent=39 // pred_check
          %p310 = pneg %p109
        $region50: #{feed_forward.1} parent=39 // pred_check_branch
          %312 = sbr.rel (%p310) target = $region52
        $region51: #{feed_forward.1} parent=39 // pred_region
          %313 = dma.done %s307, 16
        $region52: #{feed_forward.1} parent=39 // pred_fallthru
          _
        %s314 = sand.u32 %s24, 1
        %s315 = scalar_lea.sflag [#allocation10], %s314
        %s316 = sand.u32 %s122, 1
        %s317 = smul.addr %s316, 128
        %s318 = scalar_lea.vmem [#allocation9], %s317
        // Predicated region
        $region53: #{feed_forward.1} parent=39 // pred_check
          %p319 = pneg %p135
        $region54: #{feed_forward.1} parent=39 // pred_check_branch
          %321 = sbr.rel (%p319) target = $region56
        $region55: #{feed_forward.1} parent=39 // pred_region
          %322 = dma.done %s315, 2048
        $region56: #{feed_forward.1} parent=39 // pred_fallthru
          _
        // Predicated region
        $region57: #{feed_forward.1} parent=39 // pred_check
          %p323 = pneg %p156
        $region58: #{feed_forward.1} parent=39 // pred_check_branch
          %325 = sbr.rel (%p323) target = $region60
        $region59: #{feed_forward.1} parent=39 // pred_region
          %326 = dma.done [#allocation10], 16
        $region60: #{feed_forward.1} parent=39 // pred_fallthru
          _
        %p327 = pneg %p57
        %p328 = pneg %p54
        %s329 = sand.u32 %s24, 1
        %s330 = scalar_lea.sflag [#allocation7], %s329
        %s331 = sand.u32 %s70, 1
        %s332 = smul.addr %s331, 128
        %s333 = scalar_lea.vmem [#allocation6], %s332
        %p334 = pneg %p83
        %p335 = pneg %p80
        %s336 = sand.u32 %s24, 1
        %s337 = scalar_lea.sflag [#allocation7], %s336
        %s338 = sand.u32 %s96, 1
        %s339 = scalar_lea.vmem [#allocation8], %s338
        %p340 = pneg %p109
        %p341 = pneg %p106
        %s342 = sand.u32 %s24, 1
        %s343 = scalar_lea.sflag [#allocation10], %s342
        %s344 = sand.u32 %s122, 1
        %s345 = smul.addr %s344, 128
        %s346 = scalar_lea.vmem [#allocation9], %s345
        %p347 = pneg %p135
        %p348 = pneg %p132
        %p349 = pneg %p156
        %p350 = pneg %p153
        %p351 = pneg %p182
        %p352 = pneg %p179
        %s353 = smul.u32 2, %s28
        %s354 = smul.u32 16, %s29
        %s355 = smul.u32 2, %s28
        %p356 = scmp.eq.s32.totalorder %s29, 0
        // Predicated region
        $region61: #{feed_forward.1} parent=39 // pred_check
          %p357 = pneg %p356
        $region62: #{feed_forward.1} parent=39 // pred_check_branch
          %359 = sbr.rel (%p357) target = $region64
        $region63: #{feed_forward.1} parent=39 // pred_region
          %360 = vst [vmem:[#allocation2] sm:$0xff] 0.0
          %361 = vst [vmem:[#allocation2 + $0x8] sm:$0xff] 0.0
        $region64: #{feed_forward.1} parent=39 // pred_fallthru
          _
        %v362 = vld [vmem:[#allocation3] sm:$0xff]
        %v363 = vld [vmem:[#allocation3 + $0x8] sm:$0xff]
        %v364 = vld [vmem:[%s301] sm:$0xff]
        %v365 = vld [vmem:[%s301 + $0x8] sm:$0xff]
        %v366 = vld [vmem:[%s301 + $0x10] sm:$0xff]
        %v367 = vld [vmem:[%s301 + $0x18] sm:$0xff]
        %v368 = vld [vmem:[%s301 + $0x20] sm:$0xff]
        %v369 = vld [vmem:[%s301 + $0x28] sm:$0xff]
        %v370 = vld [vmem:[%s301 + $0x30] sm:$0xff]
        %v371 = vld [vmem:[%s301 + $0x38] sm:$0xff]
        %v372 = vld [vmem:[%s301 + $0x40] sm:$0xff]
        %v373 = vld [vmem:[%s301 + $0x48] sm:$0xff]
        %v374 = vld [vmem:[%s301 + $0x50] sm:$0xff]
        %v375 = vld [vmem:[%s301 + $0x58] sm:$0xff]
        %v376 = vld [vmem:[%s301 + $0x60] sm:$0xff]
        %v377 = vld [vmem:[%s301 + $0x68] sm:$0xff]
        %v378 = vld [vmem:[%s301 + $0x70] sm:$0xff]
        %v379 = vld [vmem:[%s301 + $0x78] sm:$0xff]
        %v380 = vld [vmem:[%s309] sm:$0x1]
        %v382 = vlaneseq
        %v383 = vshrl.u32 %v382, 7
        %v384 = vsub.s32 0, %v383
        %v385 = vrot.slane %v380, %v384
        %387 = vmatprep.subr.mxu0 0.0
        %388 = vmatpush1.msra.mxu0 %v364
        %389 = vmatprep.subr.mxu0 0.0
        %390 = vmatpush1.msra.mxu0 %v365
        %391 = vmatprep.subr.mxu0 0.0
        %392 = vmatpush1.msra.mxu0 %v366
        %393 = vmatprep.subr.mxu0 0.0
        %394 = vmatpush1.msra.mxu0 %v367
        %395 = vmatprep.subr.mxu0 0.0
        %396 = vmatpush1.msra.mxu0 %v368
        %397 = vmatprep.subr.mxu0 0.0
        %398 = vmatpush1.msra.mxu0 %v369
        %399 = vmatprep.subr.mxu0 0.0
        %400 = vmatpush1.msra.mxu0 %v370
        %401 = vmatprep.subr.mxu0 0.0
        %402 = vmatpush1.msra.mxu0 %v371
        %403 = vmatprep.subr.mxu0 0.0
        %404 = vmatpush1.msra.mxu0 %v372
        %405 = vmatprep.subr.mxu0 0.0
        %406 = vmatpush1.msra.mxu0 %v373
        %407 = vmatprep.subr.mxu0 0.0
        %408 = vmatpush1.msra.mxu0 %v374
        %409 = vmatprep.subr.mxu0 0.0
        %410 = vmatpush1.msra.mxu0 %v375
        %411 = vmatprep.subr.mxu0 0.0
        %412 = vmatpush1.msra.mxu0 %v376
        %413 = vmatprep.subr.mxu0 0.0
        %414 = vmatpush1.msra.mxu0 %v377
        %415 = vmatprep.subr.mxu0 0.0
        %416 = vmatpush1.msra.mxu0 %v378
        %417 = vmatprep.subr.mxu0 0.0
        %418 = vmatpush1.msra.mxu0 %v379
        %419 = vmatprep.subr.mxu0 0.0
        %420 = vmatpush1.msra.mxu0 0.0
        %421 = vmatprep.subr.mxu0 0.0
        %422 = vmatpush1.msra.mxu0 0.0
        %423 = vmatprep.subr.mxu0 0.0
        %424 = vmatpush1.msra.mxu0 0.0
        %425 = vmatprep.subr.mxu0 0.0
        %426 = vmatpush1.msra.mxu0 0.0
        %427 = vmatprep.subr.mxu0 0.0
        %428 = vmatpush1.msra.mxu0 0.0
        %429 = vmatprep.subr.mxu0 0.0
        %430 = vmatpush1.msra.mxu0 0.0
        %431 = vmatprep.subr.mxu0 0.0
        %432 = vmatpush1.msra.mxu0 0.0
        %433 = vmatprep.subr.mxu0 0.0
        %434 = vmatpush1.msra.mxu0 0.0
        %435 = vmatprep.subr.mxu0 0.0
        %436 = vmatpush1.msra.mxu0 0.0
        %437 = vmatprep.subr.mxu0 0.0
        %438 = vmatpush1.msra.mxu0 0.0
        %439 = vmatprep.subr.mxu0 0.0
        %440 = vmatpush1.msra.mxu0 0.0
        %441 = vmatprep.subr.mxu0 0.0
        %442 = vmatpush1.msra.mxu0 0.0
        %443 = vmatprep.subr.mxu0 0.0
        %444 = vmatpush1.msra.mxu0 0.0
        %445 = vmatprep.subr.mxu0 0.0
        %446 = vmatpush1.msra.mxu0 0.0
        %447 = vmatprep.subr.mxu0 0.0
        %448 = vmatpush1.msra.mxu0 0.0
        %449 = vmatprep.subr.mxu0 0.0
        %450 = vmatpush1.msra.mxu0 0.0
        %451 = vmatprep.mubr.f32.mxu0 0.0
        %452 = vmatmul.mubr.f32.gmra.mrb[0].mxu0 %v362
        %v453 = vpop.f32.mrb[0].mxu0
        %v454 = vadd.f32 %v385, %v453
        %v455 = vpop.f32.mrb[0].mxu0
        %456 = vmatprep.mubr.f32.mxu0 0.0
        %457 = vmatmul.mubr.f32.gmra.mrb[0].mxu0 %v363
        %v458 = vpop.f32.mrb[0].mxu0
        %v459 = vadd.f32 %v385, %v458
        %v460 = vpop.f32.mrb[0].mxu0
        %461 = vdwg.mxu0
        %vm462 = vcmp.gt.f32.partialorder %v454, 0.0
        %vm463 = vcmp.gt.f32.partialorder %v459, 0.0
        %v464 = vmul.f32 %v454, 0.01
        %v465 = vmul.f32 %v459, 0.01
        %v466 = vsel %vm462, %v454, %v464
        %v467 = vsel %vm463, %v459, %v465
        %v468 = vld [vmem:[#allocation2] sm:$0xff]
        %v469 = vld [vmem:[#allocation2 + $0x8] sm:$0xff]
        %v470 = vld [vmem:[%s318] sm:$0xff]
        %v471 = vld [vmem:[%s318 + $0x8] sm:$0xff]
        %v472 = vld [vmem:[%s318 + $0x10] sm:$0xff]
        %v473 = vld [vmem:[%s318 + $0x18] sm:$0xff]
        %v474 = vld [vmem:[%s318 + $0x20] sm:$0xff]
        %v475 = vld [vmem:[%s318 + $0x28] sm:$0xff]
        %v476 = vld [vmem:[%s318 + $0x30] sm:$0xff]
        %v477 = vld [vmem:[%s318 + $0x38] sm:$0xff]
        %v478 = vld [vmem:[%s318 + $0x40] sm:$0xff]
        %v479 = vld [vmem:[%s318 + $0x48] sm:$0xff]
        %v480 = vld [vmem:[%s318 + $0x50] sm:$0xff]
        %v481 = vld [vmem:[%s318 + $0x58] sm:$0xff]
        %v482 = vld [vmem:[%s318 + $0x60] sm:$0xff]
        %v483 = vld [vmem:[%s318 + $0x68] sm:$0xff]
        %v484 = vld [vmem:[%s318 + $0x70] sm:$0xff]
        %v485 = vld [vmem:[%s318 + $0x78] sm:$0xff]
        %486 = vmatprep.subr.mxu0 0.0
        %487 = vmatpush1.msra.mxu0 %v470
        %488 = vmatprep.subr.mxu0 0.0
        %489 = vmatpush1.msra.mxu0 %v471
        %490 = vmatprep.subr.mxu0 0.0
        %491 = vmatpush1.msra.mxu0 %v472
        %492 = vmatprep.subr.mxu0 0.0
        %493 = vmatpush1.msra.mxu0 %v473
        %494 = vmatprep.subr.mxu0 0.0
        %495 = vmatpush1.msra.mxu0 %v474
        %496 = vmatprep.subr.mxu0 0.0
        %497 = vmatpush1.msra.mxu0 %v475
        %498 = vmatprep.subr.mxu0 0.0
        %499 = vmatpush1.msra.mxu0 %v476
        %500 = vmatprep.subr.mxu0 0.0
        %501 = vmatpush1.msra.mxu0 %v477
        %502 = vmatprep.subr.mxu0 0.0
        %503 = vmatpush1.msra.mxu0 %v478
        %504 = vmatprep.subr.mxu0 0.0
        %505 = vmatpush1.msra.mxu0 %v479
        %506 = vmatprep.subr.mxu0 0.0
        %507 = vmatpush1.msra.mxu0 %v480
        %508 = vmatprep.subr.mxu0 0.0
        %509 = vmatpush1.msra.mxu0 %v481
        %510 = vmatprep.subr.mxu0 0.0
        %511 = vmatpush1.msra.mxu0 %v482
        %512 = vmatprep.subr.mxu0 0.0
        %513 = vmatpush1.msra.mxu0 %v483
        %514 = vmatprep.subr.mxu0 0.0
        %515 = vmatpush1.msra.mxu0 %v484
        %516 = vmatprep.subr.mxu0 0.0
        %517 = vmatpush1.msra.mxu0 %v485
        %518 = vmatprep.subr.mxu0 0.0
        %519 = vmatpush1.msra.mxu0 0.0
        %520 = vmatprep.subr.mxu0 0.0
        %521 = vmatpush1.msra.mxu0 0.0
        %522 = vmatprep.subr.mxu0 0.0
        %523 = vmatpush1.msra.mxu0 0.0
        %524 = vmatprep.subr.mxu0 0.0
        %525 = vmatpush1.msra.mxu0 0.0
        %526 = vmatprep.subr.mxu0 0.0
        %527 = vmatpush1.msra.mxu0 0.0
        %528 = vmatprep.subr.mxu0 0.0
        %529 = vmatpush1.msra.mxu0 0.0
        %530 = vmatprep.subr.mxu0 0.0
        %531 = vmatpush1.msra.mxu0 0.0
        %532 = vmatprep.subr.mxu0 0.0
        %533 = vmatpush1.msra.mxu0 0.0
        %534 = vmatprep.subr.mxu0 0.0
        %535 = vmatpush1.msra.mxu0 0.0
        %536 = vmatprep.subr.mxu0 0.0
        %537 = vmatpush1.msra.mxu0 0.0
        %538 = vmatprep.subr.mxu0 0.0
        %539 = vmatpush1.msra.mxu0 0.0
        %540 = vmatprep.subr.mxu0 0.0
        %541 = vmatpush1.msra.mxu0 0.0
        %542 = vmatprep.subr.mxu0 0.0
        %543 = vmatpush1.msra.mxu0 0.0
        %544 = vmatprep.subr.mxu0 0.0
        %545 = vmatpush1.msra.mxu0 0.0
        %546 = vmatprep.subr.mxu0 0.0
        %547 = vmatpush1.msra.mxu0 0.0
        %548 = vmatprep.subr.mxu0 0.0
        %549 = vmatpush1.msra.mxu0 0.0
        %550 = vmatprep.mubr.f32.mxu0 0.0
        %551 = vmatmul.mubr.f32.gmra.mrb[0].mxu0 %v466
        %v552 = vpop.f32.mrb[0].mxu0
        %v553 = vadd.f32 0.0, %v552
        %v554 = vpop.f32.mrb[0].mxu0
        %555 = vmatprep.mubr.f32.mxu0 0.0
        %556 = vmatmul.mubr.f32.gmra.mrb[0].mxu0 %v467
        %v557 = vpop.f32.mrb[0].mxu0
        %v558 = vadd.f32 0.0, %v557
        %v559 = vpop.f32.mrb[0].mxu0
        %560 = vdwg.mxu0
        %v561 = vadd.f32 %v468, %v553
        %v562 = vadd.f32 %v469, %v558
        %563 = vst [vmem:[#allocation2] sm:$0xff] %v561
        %564 = vst [vmem:[#allocation2 + $0x8] sm:$0xff] %v562
        %p565 = scmp.eq.s32.totalorder %s29, 1
        // Predicated region
        $region65: #{feed_forward.1} parent=39 // pred_check
          %p566 = pneg %p565
        $region66: #{feed_forward.1} parent=39 // pred_check_branch
          %568 = sbr.rel (%p566) target = $region68
        $region67: #{feed_forward.1} parent=39 // pred_region
          %v569 = vld [vmem:[#allocation2] sm:$0xff]
          %v570 = vld [vmem:[#allocation2 + $0x8] sm:$0xff]
          %v571 = vld [vmem:[#allocation11] sm:$0x1]
          %v573 = vlaneseq
          %v574 = vshrl.u32 %v573, 7
          %v575 = vsub.s32 0, %v574
          %v576 = vrot.slane %v571, %v575
          %v578 = vadd.f32 %v569, %v576
          %v579 = vadd.f32 %v570, %v576
          %580 = vst [vmem:[#allocation12] sm:$0xff] %v578
          %581 = vst [vmem:[#allocation12 + $0x8] sm:$0xff] %v579
        $region68: #{feed_forward.1} parent=39 // pred_fallthru
          _
        // Predicated region
        $region69: #{feed_forward.1} parent=39 // pred_check
          %p582 = pneg %p179
        $region70: #{feed_forward.1} parent=39 // pred_check_branch
          %584 = sbr.rel (%p582) target = $region72
        $region71: #{feed_forward.1} parent=39 // pred_region
          %s585 = smul.u32 2, %s28
          %s587 = ssub.s32 256, 256
          %588 = vsyncadd [#allocation5], %s587
          %s589 = smul.addr %s585, 128
          %s590 = scalar_lea.hbm %s5, %s589
          %s591 = sshll.u32 [#allocation12], 4
          %s592 = int_to_ptr.vmem [resolvable:$true] %s591
          %597 = dma.vmem_to_hbm [thread:$0]  %s592, 256, %s590, [#allocation5], 128, 128, 8
        $region72: #{feed_forward.1} parent=39 // pred_fallthru
          _
        // Predicated region
        $region73: #{feed_forward.1} parent=39 // pred_check
          %p598 = pneg %p179
        $region74: #{feed_forward.1} parent=39 // pred_check_branch
          %600 = sbr.rel (%p598) target = $region76
        $region75: #{feed_forward.1} parent=39 // pred_region
          %601 = dma.done [#allocation5], 256
        $region76: #{feed_forward.1} parent=39 // pred_fallthru
          _
      $region40: #{feed_forward.1} parent=5 // pred_fallthru
        _
      %p602 = scmp.le.s32.totalorder 2, %s19
      // Predicated region
      $region77: #{feed_forward.1} parent=5 // pred_check
        %p603 = pneg %p602
      $region78: #{feed_forward.1} parent=5 // pred_check_branch
        %605 = sbr.rel (%p603) target = $region80
      $region79: #{feed_forward.1} parent=5 // pred_region
        %s606 = ssub.s32 %s19, 2
      $region80: #{feed_forward.1} parent=5 // pred_fallthru
        _
    $region6: #{feed_forward.1} parent=1 // loop_footer
      %s23 = sadd.s32 1, %s19
    $region7: #{feed_forward.1} parent=1 // loop_footer_branch
      %18 = sbr.rel target = $region3
    $region8: #{feed_forward.1} parent=1 // loop_exit
      _
    %607 = vsyncpa [#allocation4], 1
    %s608 = scalar_lea.sflag [#allocation4], 1
    %609 = vsyncpa %s608, 1
    %610 = vsyncpa [#allocation7], 1
    %s611 = scalar_lea.sflag [#allocation7], 1
    %612 = vsyncpa %s611, 1
    %613 = vsyncpa [#allocation10], 1
    %s614 = scalar_lea.sflag [#allocation10], 1
    %615 = vsyncpa %s614, 1
    %616 = vsyncpa [#allocation5], 1
    %s617 = scalar_lea.sflag [#allocation5], 1
    %618 = vsyncpa %s617, 1

</llo_original>
